<compile_context>
chip_gen: v7x
topology: tpu7x:2x2x1
jax: 0.10.0
libtpu: 0.0.40
codegen_flags: <defaults>
</compile_context>

<pallas_src>
import functools

import jax
import jax.numpy as jnp
from jax.experimental import pallas as pl
from jax.experimental.pallas import tpu as pltpu


def _round_up(x, m):
    return (x + m - 1) // m * m


def _cdiv(a, b):
    return (a + b - 1) // b


def _vae_kernel(
    x_ref, eps_ref,
    we1_ref, be1_ref,
    we2_ref, be2_ref,
    wmu_ref, bmu_ref,
    wd1_ref, bd1_ref,
    wd2_ref, bd2_ref,
    wd3_ref, bd3_ref,
    out_ref,
    *, n_input, n_z, pad_w,
):
    cdt = we1_ref.dtype  # compute dtype for MXU operands (f32 or bf16)

    x = x_ref[...].astype(cdt)

    # ---- Encoder: Linear -> ReLU -> Linear -> ReLU ----
    h = jnp.dot(x, we1_ref[...], preferred_element_type=jnp.float32) + be1_ref[...]
    h = jnp.maximum(h, 0.0)
    h = jnp.dot(h.astype(cdt), we2_ref[...], preferred_element_type=jnp.float32) + be2_ref[...]
    h = jnp.maximum(h, 0.0)

    # ---- Latent heads (PyTorch code uses z_mu layer for BOTH mu and logvar) ----
    z_mu = jnp.dot(h.astype(cdt), wmu_ref[...], preferred_element_type=jnp.float32) + bmu_ref[...]
    z_logvar = z_mu  # reproduce the bug: z_logvar = self.z_mu(h)

    # ---- Reparameterize: z = mu + eps * exp(0.5*logvar) ----
    sigma = jnp.exp(0.5 * z_logvar)
    z = z_mu + eps_ref[...] * sigma

    # ---- Decoder: Linear -> ReLU -> Linear -> ReLU -> Linear -> Sigmoid ----
    d = jnp.dot(z.astype(cdt), wd1_ref[...], preferred_element_type=jnp.float32) + bd1_ref[...]
    d = jnp.maximum(d, 0.0)
    d = jnp.dot(d.astype(cdt), wd2_ref[...], preferred_element_type=jnp.float32) + bd2_ref[...]
    d = jnp.maximum(d, 0.0)
    d = jnp.dot(d.astype(cdt), wd3_ref[...], preferred_element_type=jnp.float32) + bd3_ref[...]
    x_reconstr = jax.nn.sigmoid(d)

    # ---- Pack results into one lane-dense 128-wide slab, single full store ----
    # Layout: [0:n_input) = x_reconstr, [n_input:n_input+n_z) = z_mu,
    #         [n_input+n_z:n_input+2*n_z) = z, rest = explicit zeros padding.
    tm = x_reconstr.shape[0]
    packed = jnp.concatenate(
        [x_reconstr, z_mu, z, jnp.zeros((tm, pad_w), jnp.float32)], axis=-1
    )
    out_ref[...] = packed


def vae_reconstruct(x, eps, params, *, block_m=512, compute_dtype=jnp.float32):
    """Fused VAE forward (encoder -> reparameterize -> decoder).

    Returns (x_reconstr_mean, z_mu, z), matching VAE.reconstruct plus the
    latent intermediates.  `compute_dtype=jnp.bfloat16` enables the bf16 MXU
    path (bf16 operands, f32 accumulation) for v6e/v7x.
    """
    B, n_input = x.shape
    n_z = params["wmu"].shape[1]
    h1 = params["we1"].shape[1]
    h2 = params["we2"].shape[1]
    d1 = params["wd1"].shape[1]
    d2 = params["wd2"].shape[1]

    # ---- Batch tiling: balanced tiles, >=2 tiles when possible (v7x megacore) ----
    num_tiles = max(1, _cdiv(B, block_m))
    if num_tiles == 1 and B >= 16:
        # Give both TensorCores work on v7x (dimension_semantics "parallel").
        num_tiles = 2
    tm = _round_up(_cdiv(B, num_tiles), 8)
    padded_b = tm * num_tiles
    if padded_b != B:
        x = jnp.pad(x, ((0, padded_b - B), (0, 0)))
        eps = jnp.pad(eps, ((0, padded_b - B), (0, 0)))

    packed_w = _round_up(n_input + 2 * n_z, 128)
    pad_w = packed_w - (n_input + 2 * n_z)

    # Weights in compute dtype (bf16 halves DMA/VMEM on v6e/v7x); biases in f32
    # so the bias add / activations stay in f32 precision.
    weight_args = (
        params["we1"].astype(compute_dtype), params["be1"],
        params["we2"].astype(compute_dtype), params["be2"],
        params["wmu"].astype(compute_dtype), params["bmu"],
        params["wd1"].astype(compute_dtype), params["bd1"],
        params["wd2"].astype(compute_dtype), params["bd2"],
        params["wd3"].astype(compute_dtype), params["bd3"],
    )

    def _resident_spec(arr):
        # Full-array block, constant index -> stays resident in VMEM across
        # all grid steps (no re-DMA per batch tile).
        return pl.BlockSpec(arr.shape, lambda i: (0,) * arr.ndim)

    in_specs = [
        pl.BlockSpec((tm, n_input), lambda i: (i, 0)),   # x
        pl.BlockSpec((tm, n_z), lambda i: (i, 0)),       # eps
    ] + [_resident_spec(w) for w in weight_args]

    out_spec = pl.BlockSpec((tm, packed_w), lambda i: (i, 0))
    out_shape = jax.ShapeDtypeStruct((padded_b, packed_w), jnp.float32)

    flops = 2 * padded_b * (
        n_input * h1 + h1 * h2 + h2 * n_z + n_z * d1 + d1 * d2 + d2 * n_input
    )
    transcendentals = padded_b * (n_z + n_input)  # exp for sigma + sigmoid
    param_bytes = sum(int(p.size) * p.dtype.itemsize for p in weight_args)
    bytes_accessed = (
        int(x.size) * 4 + int(eps.size) * 4 + param_bytes + padded_b * packed_w * 4
    )

    kernel = functools.partial(_vae_kernel, n_input=n_input, n_z=n_z, pad_w=pad_w)

    packed = pl.pallas_call(
        kernel,
        out_shape=out_shape,
        grid=(num_tiles,),
        in_specs=in_specs,
        out_specs=out_spec,
        compiler_params=pltpu.CompilerParams(
            dimension_semantics=("parallel",),   # batch tiles split across TCs (v7x)
            vmem_limit_bytes=16 * 1024 * 1024,   # modest; actual footprint << 1 MiB
        ),
        cost_estimate=pl.CostEstimate(
            flops=flops,
            transcendentals=transcendentals,
            bytes_accessed=bytes_accessed,
        ),
    )(x, eps, *weight_args)

    # TODO(synk): downstream consumers could use the packed slab directly to
    # avoid re-materializing three HBM arrays; the split here matches the
    # PyTorch API surface (reconstruct + latents).
    x_reconstr = packed[:B, :n_input]
    z_mu = packed[:B, n_input:n_input + n_z]
    z = packed[:B, n_input + n_z:n_input + 2 * n_z]
    return x_reconstr, z_mu, z


# ---------------- parameter init (xavier_uniform, gain=0.5; bias = 0) -------
def _xavier_uniform(key, fan_in, fan_out, gain=0.5):
    limit = gain * jnp.sqrt(6.0 / (fan_in + fan_out))
    # stored as [in, out] so the kernel computes x @ W
    return jax.random.uniform(
        key, (fan_in, fan_out), dtype=jnp.float32, minval=-limit, maxval=limit
    )


def init_params(key, net_arch):
    ks = jax.random.split(key, 6)
    p = {}
    p["we1"] = _xavier_uniform(ks[0], net_arch["n_input"], net_arch["n_hidden_encoder1"])
    p["be1"] = jnp.zeros((1, net_arch["n_hidden_encoder1"]), jnp.float32)
    p["we2"] = _xavier_uniform(ks[1], net_arch["n_hidden_encoder1"], net_arch["n_hidden_encoder2"])
    p["be2"] = jnp.zeros((1, net_arch["n_hidden_encoder2"]), jnp.float32)
    p["wmu"] = _xavier_uniform(ks[2], net_arch["n_hidden_encoder2"], net_arch["n_z"])
    p["bmu"] = jnp.zeros((1, net_arch["n_z"]), jnp.float32)
    p["wd1"] = _xavier_uniform(ks[3], net_arch["n_z"], net_arch["n_hidden_decoder1"])
    p["bd1"] = jnp.zeros((1, net_arch["n_hidden_decoder1"]), jnp.float32)
    p["wd2"] = _xavier_uniform(ks[4], net_arch["n_hidden_decoder1"], net_arch["n_hidden_decoder2"])
    p["bd2"] = jnp.zeros((1, net_arch["n_hidden_decoder2"]), jnp.float32)
    p["wd3"] = _xavier_uniform(ks[5], net_arch["n_hidden_decoder2"], net_arch["n_input"])
    p["bd3"] = jnp.zeros((1, net_arch["n_input"]), jnp.float32)
    return p


def vae_reconstruct_ref(x, eps, params):
    """Pure-JAX reference for correctness checking."""
    h = jnp.maximum(x @ params["we1"] + params["be1"], 0.0)
    h = jnp.maximum(h @ params["we2"] + params["be2"], 0.0)
    z_mu = h @ params["wmu"] + params["bmu"]
    z_logvar = z_mu
    z = z_mu + eps * jnp.sqrt(jnp.exp(z_logvar))
    d = jnp.maximum(z @ params["wd1"] + params["bd1"], 0.0)
    d = jnp.maximum(d @ params["wd2"] + params["bd2"], 0.0)
    xr = jax.nn.sigmoid(d @ params["wd3"] + params["bd3"])
    return xr, z_mu, z


def _run_and_check(batch, net_arch, params, key, *, compute_dtype=jnp.float32,
                   atol=1e-5, rtol=1e-5, block_m=512):
    k_x, k_eps = jax.random.split(key)
    x = jax.random.uniform(k_x, (batch, net_arch["n_input"]), dtype=jnp.float32)
    eps = jax.random.normal(k_eps, (batch, net_arch["n_z"]), dtype=jnp.float32)

    xr, z_mu, z = vae_reconstruct(
        x, eps, params, block_m=block_m, compute_dtype=compute_dtype
    )
    xr = jax.block_until_ready(xr)
    z_mu = jax.block_until_ready(z_mu)
    z = jax.block_until_ready(z)

    xr_ref, zmu_ref, z_ref = vae_reconstruct_ref(x, eps, params)
    assert jnp.allclose(xr, xr_ref, atol=atol, rtol=rtol)
    assert jnp.allclose(z_mu, zmu_ref, atol=atol, rtol=rtol)
    assert jnp.allclose(z, z_ref, atol=atol, rtol=rtol)


if __name__ == "__main__":
    net_arch = {
        "n_input": 64,
        "n_hidden_encoder1": 32,
        "n_hidden_encoder2": 32,
        "n_z": 8,
        "n_hidden_decoder1": 32,
        "n_hidden_decoder2": 32,
    }

    key = jax.random.PRNGKey(0)
    k_params, k_small, k_big, k_bf16 = jax.random.split(key, 4)
    params = init_params(k_params, net_arch)

    # Small batch (single 8-row tile).
    _run_and_check(8, net_arch, params, k_small)
    # Ragged batch: balanced into 2 tiles of 104 rows (exercises pipelining,
    # tail handling, and the parallel dimension semantics for v7x megacore).
    _run_and_check(200, net_arch, params, k_big)
    # bf16 MXU path (v6e/v7x optimization): bf16 operands, f32 accumulation.
    _run_and_check(64, net_arch, params, k_bf16,
                   compute_dtype=jnp.bfloat16, atol=2e-2, rtol=2e-2)

    print("KERNEL_OK")
</pallas_src>

<mosaic_0001>
module attributes {stable_mosaic.version = 11 : i64} {
  func.func @_vae_kernel(%arg0: i32, %arg1: memref<8x64xf32, #tpu.memory_space<vmem>>, %arg2: memref<8x8xf32, #tpu.memory_space<vmem>>, %arg3: memref<64x32xf32, #tpu.memory_space<vmem>>, %arg4: memref<1x32xf32, #tpu.memory_space<vmem>>, %arg5: memref<32x32xf32, #tpu.memory_space<vmem>>, %arg6: memref<1x32xf32, #tpu.memory_space<vmem>>, %arg7: memref<32x8xf32, #tpu.memory_space<vmem>>, %arg8: memref<1x8xf32, #tpu.memory_space<vmem>>, %arg9: memref<8x32xf32, #tpu.memory_space<vmem>>, %arg10: memref<1x32xf32, #tpu.memory_space<vmem>>, %arg11: memref<32x32xf32, #tpu.memory_space<vmem>>, %arg12: memref<1x32xf32, #tpu.memory_space<vmem>>, %arg13: memref<32x64xf32, #tpu.memory_space<vmem>>, %arg14: memref<1x64xf32, #tpu.memory_space<vmem>>, %arg15: memref<8x128xf32, #tpu.memory_space<vmem>>) attributes {dimension_semantics = [#tpu.dimension_semantics<parallel>], iteration_bounds = array<i64: 1>, scalar_prefetch = 0 : i64, scratch_operands = 0 : i64, tpu.core_type = #tpu.core_type<tc>, window_params = [{transform_indices = @transform_0, window_bounds = array<i64: 8, 64>}, {transform_indices = @transform_1, window_bounds = array<i64: 8, 8>}, {pipeline_mode = #tpu.pipeline_mode<synchronous>, transform_indices = @transform_2, window_bounds = array<i64: 64, 32>}, {pipeline_mode = #tpu.pipeline_mode<synchronous>, transform_indices = @transform_3, window_bounds = array<i64: 1, 32>}, {pipeline_mode = #tpu.pipeline_mode<synchronous>, transform_indices = @transform_4, window_bounds = array<i64: 32, 32>}, {pipeline_mode = #tpu.pipeline_mode<synchronous>, transform_indices = @transform_5, window_bounds = array<i64: 1, 32>}, {pipeline_mode = #tpu.pipeline_mode<synchronous>, transform_indices = @transform_6, window_bounds = array<i64: 32, 8>}, {pipeline_mode = #tpu.pipeline_mode<synchronous>, transform_indices = @transform_7, window_bounds = array<i64: 1, 8>}, {pipeline_mode = #tpu.pipeline_mode<synchronous>, transform_indices = @transform_8, window_bounds = array<i64: 8, 32>}, {pipeline_mode = #tpu.pipeline_mode<synchronous>, transform_indices = @transform_9, window_bounds = array<i64: 1, 32>}, {pipeline_mode = #tpu.pipeline_mode<synchronous>, transform_indices = @transform_10, window_bounds = array<i64: 32, 32>}, {pipeline_mode = #tpu.pipeline_mode<synchronous>, transform_indices = @transform_11, window_bounds = array<i64: 1, 32>}, {pipeline_mode = #tpu.pipeline_mode<synchronous>, transform_indices = @transform_12, window_bounds = array<i64: 32, 64>}, {pipeline_mode = #tpu.pipeline_mode<synchronous>, transform_indices = @transform_13, window_bounds = array<i64: 1, 64>}, {transform_indices = @transform_14, window_bounds = array<i64: 8, 128>}]} {
    %c0 = arith.constant 0 : index
    %c0_0 = arith.constant 0 : index
    %0 = vector.load %arg1[%c0, %c0_0] : memref<8x64xf32, #tpu.memory_space<vmem>>, vector<8x64xf32>
    %c0_1 = arith.constant 0 : index
    %c0_2 = arith.constant 0 : index
    %1 = vector.load %arg3[%c0_1, %c0_2] : memref<64x32xf32, #tpu.memory_space<vmem>>, vector<64x32xf32>
    %cst = arith.constant dense<0.000000e+00> : vector<8x32xf32>
    %2 = tpu.matmul %0, %1, %cst {dimension_numbers = #tpu.dot_dimension_numbers<[1], [0], [0], [1], [0, 0, 1, 1], [], []>} : vector<8x64xf32>, vector<64x32xf32>, vector<8x32xf32> -> vector<8x32xf32>
    %c0_3 = arith.constant 0 : index
    %c0_4 = arith.constant 0 : index
    %3 = vector.load %arg4[%c0_3, %c0_4] : memref<1x32xf32, #tpu.memory_space<vmem>>, vector<1x32xf32>
    %4 = vector.broadcast %3 : vector<1x32xf32> to vector<8x32xf32>
    %5 = arith.addf %2, %4 : vector<8x32xf32>
    %cst_5 = arith.constant 0.000000e+00 : f32
    %6 = vector.broadcast %cst_5 : f32 to vector<8x32xf32>
    %7 = arith.maximumf %5, %6 : vector<8x32xf32>
    %c0_6 = arith.constant 0 : index
    %c0_7 = arith.constant 0 : index
    %8 = vector.load %arg5[%c0_6, %c0_7] : memref<32x32xf32, #tpu.memory_space<vmem>>, vector<32x32xf32>
    %cst_8 = arith.constant dense<0.000000e+00> : vector<8x32xf32>
    %9 = tpu.matmul %7, %8, %cst_8 {dimension_numbers = #tpu.dot_dimension_numbers<[1], [0], [0], [1], [0, 0, 1, 1], [], []>} : vector<8x32xf32>, vector<32x32xf32>, vector<8x32xf32> -> vector<8x32xf32>
    %c0_9 = arith.constant 0 : index
    %c0_10 = arith.constant 0 : index
    %10 = vector.load %arg6[%c0_9, %c0_10] : memref<1x32xf32, #tpu.memory_space<vmem>>, vector<1x32xf32>
    %11 = vector.broadcast %10 : vector<1x32xf32> to vector<8x32xf32>
    %12 = arith.addf %9, %11 : vector<8x32xf32>
    %cst_11 = arith.constant 0.000000e+00 : f32
    %13 = vector.broadcast %cst_11 : f32 to vector<8x32xf32>
    %14 = arith.maximumf %12, %13 : vector<8x32xf32>
    %c0_12 = arith.constant 0 : index
    %c0_13 = arith.constant 0 : index
    %15 = vector.load %arg7[%c0_12, %c0_13] : memref<32x8xf32, #tpu.memory_space<vmem>>, vector<32x8xf32>
    %cst_14 = arith.constant dense<0.000000e+00> : vector<8x8xf32>
    %16 = tpu.matmul %14, %15, %cst_14 {dimension_numbers = #tpu.dot_dimension_numbers<[1], [0], [0], [1], [0, 0, 1, 1], [], []>} : vector<8x32xf32>, vector<32x8xf32>, vector<8x8xf32> -> vector<8x8xf32>
    %c0_15 = arith.constant 0 : index
    %c0_16 = arith.constant 0 : index
    %17 = vector.load %arg8[%c0_15, %c0_16] : memref<1x8xf32, #tpu.memory_space<vmem>>, vector<1x8xf32>
    %18 = vector.broadcast %17 : vector<1x8xf32> to vector<8x8xf32>
    %19 = arith.addf %16, %18 : vector<8x8xf32>
    %cst_17 = arith.constant 5.000000e-01 : f32
    %20 = vector.broadcast %cst_17 : f32 to vector<8x8xf32>
    %21 = arith.mulf %20, %19 : vector<8x8xf32>
    %22 = math.exp %21 : vector<8x8xf32>
    %c0_18 = arith.constant 0 : index
    %c0_19 = arith.constant 0 : index
    %23 = vector.load %arg2[%c0_18, %c0_19] : memref<8x8xf32, #tpu.memory_space<vmem>>, vector<8x8xf32>
    %24 = arith.mulf %23, %22 : vector<8x8xf32>
    %25 = arith.addf %19, %24 : vector<8x8xf32>
    %c0_20 = arith.constant 0 : index
    %c0_21 = arith.constant 0 : index
    %26 = vector.load %arg9[%c0_20, %c0_21] : memref<8x32xf32, #tpu.memory_space<vmem>>, vector<8x32xf32>
    %cst_22 = arith.constant dense<0.000000e+00> : vector<8x32xf32>
    %27 = tpu.matmul %25, %26, %cst_22 {dimension_numbers = #tpu.dot_dimension_numbers<[1], [0], [0], [1], [0, 0, 1, 1], [], []>} : vector<8x8xf32>, vector<8x32xf32>, vector<8x32xf32> -> vector<8x32xf32>
    %c0_23 = arith.constant 0 : index
    %c0_24 = arith.constant 0 : index
    %28 = vector.load %arg10[%c0_23, %c0_24] : memref<1x32xf32, #tpu.memory_space<vmem>>, vector<1x32xf32>
    %29 = vector.broadcast %28 : vector<1x32xf32> to vector<8x32xf32>
    %30 = arith.addf %27, %29 : vector<8x32xf32>
    %cst_25 = arith.constant 0.000000e+00 : f32
    %31 = vector.broadcast %cst_25 : f32 to vector<8x32xf32>
    %32 = arith.maximumf %30, %31 : vector<8x32xf32>
    %c0_26 = arith.constant 0 : index
    %c0_27 = arith.constant 0 : index
    %33 = vector.load %arg11[%c0_26, %c0_27] : memref<32x32xf32, #tpu.memory_space<vmem>>, vector<32x32xf32>
    %cst_28 = arith.constant dense<0.000000e+00> : vector<8x32xf32>
    %34 = tpu.matmul %32, %33, %cst_28 {dimension_numbers = #tpu.dot_dimension_numbers<[1], [0], [0], [1], [0, 0, 1, 1], [], []>} : vector<8x32xf32>, vector<32x32xf32>, vector<8x32xf32> -> vector<8x32xf32>
    %c0_29 = arith.constant 0 : index
    %c0_30 = arith.constant 0 : index
    %35 = vector.load %arg12[%c0_29, %c0_30] : memref<1x32xf32, #tpu.memory_space<vmem>>, vector<1x32xf32>
    %36 = vector.broadcast %35 : vector<1x32xf32> to vector<8x32xf32>
    %37 = arith.addf %34, %36 : vector<8x32xf32>
    %cst_31 = arith.constant 0.000000e+00 : f32
    %38 = vector.broadcast %cst_31 : f32 to vector<8x32xf32>
    %39 = arith.maximumf %37, %38 : vector<8x32xf32>
    %c0_32 = arith.constant 0 : index
    %c0_33 = arith.constant 0 : index
    %40 = vector.load %arg13[%c0_32, %c0_33] : memref<32x64xf32, #tpu.memory_space<vmem>>, vector<32x64xf32>
    %cst_34 = arith.constant dense<0.000000e+00> : vector<8x64xf32>
    %41 = tpu.matmul %39, %40, %cst_34 {dimension_numbers = #tpu.dot_dimension_numbers<[1], [0], [0], [1], [0, 0, 1, 1], [], []>} : vector<8x32xf32>, vector<32x64xf32>, vector<8x64xf32> -> vector<8x64xf32>
    %c0_35 = arith.constant 0 : index
    %c0_36 = arith.constant 0 : index
    %42 = vector.load %arg14[%c0_35, %c0_36] : memref<1x64xf32, #tpu.memory_space<vmem>>, vector<1x64xf32>
    %43 = vector.broadcast %42 : vector<1x64xf32> to vector<8x64xf32>
    %44 = arith.addf %41, %43 : vector<8x64xf32>
    %45 = arith.negf %44 : vector<8x64xf32>
    %46 = math.exp %45 : vector<8x64xf32>
    %cst_37 = arith.constant 1.000000e+00 : f32
    %47 = vector.broadcast %cst_37 : f32 to vector<8x64xf32>
    %48 = arith.addf %47, %46 : vector<8x64xf32>
    %49 = arith.divf %47, %48 : vector<8x64xf32>
    %cst_38 = arith.constant 0.000000e+00 : f32
    %50 = vector.broadcast %cst_38 : f32 to vector<8x48xf32>
    %51 = tpu.concatenate %49, %19, %25, %50 in 1 : vector<8x64xf32>, vector<8x8xf32>, vector<8x8xf32>, vector<8x48xf32> -> vector<8x128xf32>
    %c0_39 = arith.constant 0 : index
    %c0_40 = arith.constant 0 : index
    %52 = vector.load %arg15[%c0_39, %c0_40] : memref<8x128xf32, #tpu.memory_space<vmem>>, vector<8x128xf32>
    tpu.vector_store %arg15[%c0_39, %c0_40], %51 {strides = array<i32>} : memref<8x128xf32, #tpu.memory_space<vmem>>, vector<8x128xf32>,
    return
  }
  func.func @transform_0(%arg0: i32) -> (i32, i32) {
    %c0_i32 = arith.constant 0 : i32
    %c0_i32_0 = arith.constant 0 : i32
    return %arg0, %c0_i32 : i32, i32
  }
  func.func @transform_1(%arg0: i32) -> (i32, i32) {
    %c0_i32 = arith.constant 0 : i32
    %c0_i32_0 = arith.constant 0 : i32
    return %arg0, %c0_i32 : i32, i32
  }
  func.func @transform_2(%arg0: i32) -> (i32, i32) {
    %c0_i32 = arith.constant 0 : i32
    %c0_i32_0 = arith.constant 0 : i32
    %c0_i32_1 = arith.constant 0 : i32
    return %c0_i32, %c0_i32_0 : i32, i32
  }
  func.func @transform_3(%arg0: i32) -> (i32, i32) {
    %c0_i32 = arith.constant 0 : i32
    %c0_i32_0 = arith.constant 0 : i32
    %c0_i32_1 = arith.constant 0 : i32
    return %c0_i32, %c0_i32_0 : i32, i32
  }
  func.func @transform_4(%arg0: i32) -> (i32, i32) {
    %c0_i32 = arith.constant 0 : i32
    %c0_i32_0 = arith.constant 0 : i32
    %c0_i32_1 = arith.constant 0 : i32
    return %c0_i32, %c0_i32_0 : i32, i32
  }
  func.func @transform_5(%arg0: i32) -> (i32, i32) {
    %c0_i32 = arith.constant 0 : i32
    %c0_i32_0 = arith.constant 0 : i32
    %c0_i32_1 = arith.constant 0 : i32
    return %c0_i32, %c0_i32_0 : i32, i32
  }
  func.func @transform_6(%arg0: i32) -> (i32, i32) {
    %c0_i32 = arith.constant 0 : i32
    %c0_i32_0 = arith.constant 0 : i32
    %c0_i32_1 = arith.constant 0 : i32
    return %c0_i32, %c0_i32_0 : i32, i32
  }
  func.func @transform_7(%arg0: i32) -> (i32, i32) {
    %c0_i32 = arith.constant 0 : i32
    %c0_i32_0 = arith.constant 0 : i32
    %c0_i32_1 = arith.constant 0 : i32
    return %c0_i32, %c0_i32_0 : i32, i32
  }
  func.func @transform_8(%arg0: i32) -> (i32, i32) {
    %c0_i32 = arith.constant 0 : i32
    %c0_i32_0 = arith.constant 0 : i32
    %c0_i32_1 = arith.constant 0 : i32
    return %c0_i32, %c0_i32_0 : i32, i32
  }
  func.func @transform_9(%arg0: i32) -> (i32, i32) {
    %c0_i32 = arith.constant 0 : i32
    %c0_i32_0 = arith.constant 0 : i32
    %c0_i32_1 = arith.constant 0 : i32
    return %c0_i32, %c0_i32_0 : i32, i32
  }
  func.func @transform_10(%arg0: i32) -> (i32, i32) {
    %c0_i32 = arith.constant 0 : i32
    %c0_i32_0 = arith.constant 0 : i32
    %c0_i32_1 = arith.constant 0 : i32
    return %c0_i32, %c0_i32_0 : i32, i32
  }
  func.func @transform_11(%arg0: i32) -> (i32, i32) {
    %c0_i32 = arith.constant 0 : i32
    %c0_i32_0 = arith.constant 0 : i32
    %c0_i32_1 = arith.constant 0 : i32
    return %c0_i32, %c0_i32_0 : i32, i32
  }
  func.func @transform_12(%arg0: i32) -> (i32, i32) {
    %c0_i32 = arith.constant 0 : i32
    %c0_i32_0 = arith.constant 0 : i32
    %c0_i32_1 = arith.constant 0 : i32
    return %c0_i32, %c0_i32_0 : i32, i32
  }
  func.func @transform_13(%arg0: i32) -> (i32, i32) {
    %c0_i32 = arith.constant 0 : i32
    %c0_i32_0 = arith.constant 0 : i32
    %c0_i32_1 = arith.constant 0 : i32
    return %c0_i32, %c0_i32_0 : i32, i32
  }
  func.func @transform_14(%arg0: i32) -> (i32, i32) {
    %c0_i32 = arith.constant 0 : i32
    %c0_i32_0 = arith.constant 0 : i32
    return %arg0, %c0_i32 : i32, i32
  }
}

</mosaic_0001>

<llo_original>
// kernel: tpu_custom_call.1
$region0: #{tpu_custom_call.1}
  #allocation0 [shape = 'u32[]', space=smem, size = 0x4, offset = 0x4, fixed_abs, tag = 'smem constant byte address 0x4 - core index']
  #allocation1 [shape = 'u32[144,128]{1,0:T(1,128)}', space=vmem, size = 0x12000, scoped, tag = 'internal scratch']
  %s0 = inlined_call_operand.vmem [shape: f32[8,64], index: 0, kind: input, shape index: {}]
  %s1 = inlined_call_operand.hbm [shape: f32[8,8], index: 1, kind: input, shape index: {}]
  %s2 = inlined_call_operand.vmem [shape: f32[64,32], index: 2, kind: input, shape index: {}]
  %s3 = inlined_call_operand.vmem [shape: f32[1,32], index: 3, kind: input, shape index: {}]
  %s4 = inlined_call_operand.vmem [shape: f32[32,32], index: 4, kind: input, shape index: {}]
  %s5 = inlined_call_operand.vmem [shape: f32[1,32], index: 5, kind: input, shape index: {}]
  %s6 = inlined_call_operand.vmem [shape: f32[32,8], index: 6, kind: input, shape index: {}]
  %s7 = inlined_call_operand.vmem [shape: f32[1,8], index: 7, kind: input, shape index: {}]
  %s8 = inlined_call_operand.vmem [shape: f32[8,32], index: 8, kind: input, shape index: {}]
  %s9 = inlined_call_operand.vmem [shape: f32[1,32], index: 9, kind: input, shape index: {}]
  %s10 = inlined_call_operand.vmem [shape: f32[32,32], index: 10, kind: input, shape index: {}]
  %s11 = inlined_call_operand.vmem [shape: f32[1,32], index: 11, kind: input, shape index: {}]
  %s12 = inlined_call_operand.vmem [shape: f32[32,64], index: 12, kind: input, shape index: {}]
  %s13 = inlined_call_operand.vmem [shape: f32[1,64], index: 13, kind: input, shape index: {}]
  %s14 = inlined_call_operand.hbm [shape: f32[8,128], index: 14, kind: output, shape index: {}]
  %s15 = sld [smem:[#allocation0]]
  $region70: #{tpu_custom_call.1} parent=0
    _
  %s17 = ssub.s32 1, %s15
  %s18 = scalar_select 0, %s17, %s15
  $region1: #{tpu_custom_call.1} parent=0
    #allocation2 [shape = 'u8[4096]{0}', space=vmem, size = 0x1000, scoped, tag = 'input window, operand 1, single buffered']
    #allocation3 [shape = 's32[1]{0}', space=sflag, size = 0x4, scoped, tag = 'scoped memory for tpu_custom_call.1']
    #allocation4 [shape = 's32[1]{0}', space=sflag, size = 0x4, scoped, tag = 'scoped memory for tpu_custom_call.1']
    #allocation5 [shape = 'u8[4096]{0}', space=vmem, size = 0x1000, scoped, tag = 'output window, operand 0, single buffered']
    %19 = vsyncpa [#allocation3], 0
    %20 = vsyncpa [#allocation4], 0
    // Predicated region
    $region2: #{tpu_custom_call.1} parent=1 // pred_check
      _
    $region3: #{tpu_custom_call.1} parent=1 // pred_check_branch
      %22 = sbr.rel (0) target = $region5
    $region4: #{tpu_custom_call.1} parent=1 // pred_region
      _
    $region5: #{tpu_custom_call.1} parent=1 // pred_fallthru
      _
    // Predicated region
    $region6: #{tpu_custom_call.1} parent=1 // pred_check
      _
    $region7: #{tpu_custom_call.1} parent=1 // pred_check_branch
      %24 = sbr.rel (0) target = $region9
    $region8: #{tpu_custom_call.1} parent=1 // pred_region
      %s26 = ssub.s32 128, 128
      %27 = vsyncadd [#allocation3], %s26
      %s29 = sshll.u32 [#allocation2], 4
      %s30 = int_to_ptr.vmem [resolvable:$true] %s29
      %32 = dma.hbm_to_vmem [thread:$0]  %s1, 128, %s30, [#allocation3]
    $region9: #{tpu_custom_call.1} parent=1 // pred_fallthru
      _
    // Predicated region
    $region10: #{tpu_custom_call.1} parent=1 // pred_check
      _
    $region11: #{tpu_custom_call.1} parent=1 // pred_check_branch
      %34 = sbr.rel (0) target = $region13
    $region12: #{tpu_custom_call.1} parent=1 // pred_region
      _
    $region13: #{tpu_custom_call.1} parent=1 // pred_fallthru
      _
    // Predicated region
    $region14: #{tpu_custom_call.1} parent=1 // pred_check
      _
    $region15: #{tpu_custom_call.1} parent=1 // pred_check_branch
      %36 = sbr.rel (0) target = $region17
    $region16: #{tpu_custom_call.1} parent=1 // pred_region
      _
    $region17: #{tpu_custom_call.1} parent=1 // pred_fallthru
      _
    // Predicated region
    $region18: #{tpu_custom_call.1} parent=1 // pred_check
      _
    $region19: #{tpu_custom_call.1} parent=1 // pred_check_branch
      %38 = sbr.rel (0) target = $region21
    $region20: #{tpu_custom_call.1} parent=1 // pred_region
      _
    $region21: #{tpu_custom_call.1} parent=1 // pred_fallthru
      _
    // Predicated region
    $region22: #{tpu_custom_call.1} parent=1 // pred_check
      _
    $region23: #{tpu_custom_call.1} parent=1 // pred_check_branch
      %40 = sbr.rel (0) target = $region25
    $region24: #{tpu_custom_call.1} parent=1 // pred_region
      _
    $region25: #{tpu_custom_call.1} parent=1 // pred_fallthru
      _
    // Predicated region
    $region26: #{tpu_custom_call.1} parent=1 // pred_check
      _
    $region27: #{tpu_custom_call.1} parent=1 // pred_check_branch
      %42 = sbr.rel (0) target = $region29
    $region28: #{tpu_custom_call.1} parent=1 // pred_region
      _
    $region29: #{tpu_custom_call.1} parent=1 // pred_fallthru
      _
    // Predicated region
    $region30: #{tpu_custom_call.1} parent=1 // pred_check
      _
    $region31: #{tpu_custom_call.1} parent=1 // pred_check_branch
      %44 = sbr.rel (0) target = $region33
    $region32: #{tpu_custom_call.1} parent=1 // pred_region
      _
    $region33: #{tpu_custom_call.1} parent=1 // pred_fallthru
      _
    // Predicated region
    $region34: #{tpu_custom_call.1} parent=1 // pred_check
      _
    $region35: #{tpu_custom_call.1} parent=1 // pred_check_branch
      %46 = sbr.rel (0) target = $region37
    $region36: #{tpu_custom_call.1} parent=1 // pred_region
      _
    $region37: #{tpu_custom_call.1} parent=1 // pred_fallthru
      _
    // Predicated region
    $region38: #{tpu_custom_call.1} parent=1 // pred_check
      _
    $region39: #{tpu_custom_call.1} parent=1 // pred_check_branch
      %48 = sbr.rel (0) target = $region41
    $region40: #{tpu_custom_call.1} parent=1 // pred_region
      _
    $region41: #{tpu_custom_call.1} parent=1 // pred_fallthru
      _
    // Predicated region
    $region42: #{tpu_custom_call.1} parent=1 // pred_check
      _
    $region43: #{tpu_custom_call.1} parent=1 // pred_check_branch
      %50 = sbr.rel (0) target = $region45
    $region44: #{tpu_custom_call.1} parent=1 // pred_region
      _
    $region45: #{tpu_custom_call.1} parent=1 // pred_fallthru
      _
    // Predicated region
    $region46: #{tpu_custom_call.1} parent=1 // pred_check
      _
    $region47: #{tpu_custom_call.1} parent=1 // pred_check_branch
      %52 = sbr.rel (0) target = $region49
    $region48: #{tpu_custom_call.1} parent=1 // pred_region
      _
    $region49: #{tpu_custom_call.1} parent=1 // pred_fallthru
      _
    // Predicated region
    $region50: #{tpu_custom_call.1} parent=1 // pred_check
      _
    $region51: #{tpu_custom_call.1} parent=1 // pred_check_branch
      %54 = sbr.rel (0) target = $region53
    $region52: #{tpu_custom_call.1} parent=1 // pred_region
      _
    $region53: #{tpu_custom_call.1} parent=1 // pred_fallthru
      _
    // Predicated region
    $region54: #{tpu_custom_call.1} parent=1 // pred_check
      _
    $region55: #{tpu_custom_call.1} parent=1 // pred_check_branch
      %56 = sbr.rel (0) target = $region57
    $region56: #{tpu_custom_call.1} parent=1 // pred_region
      _
    $region57: #{tpu_custom_call.1} parent=1 // pred_fallthru
      _
    // Predicated region
    $region58: #{tpu_custom_call.1} parent=1 // pred_check
      _
    $region59: #{tpu_custom_call.1} parent=1 // pred_check_branch
      %58 = sbr.rel (0) target = $region61
    $region60: #{tpu_custom_call.1} parent=1 // pred_region
      %59 = dma.done [#allocation3], 128
    $region61: #{tpu_custom_call.1} parent=1 // pred_fallthru
      _
    %v60 = vld [vmem:[%s0] sm:$0xff]
    %v61 = vld [vmem:[%s2] sm:$0xff]
    %v62 = vld [vmem:[%s2 + $0x8] sm:$0xff]
    %v63 = vld [vmem:[%s2 + $0x10] sm:$0xff]
    %v64 = vld [vmem:[%s2 + $0x18] sm:$0xff]
    %v65 = vld [vmem:[%s2 + $0x20] sm:$0xff]
    %v66 = vld [vmem:[%s2 + $0x28] sm:$0xff]
    %v67 = vld [vmem:[%s2 + $0x30] sm:$0xff]
    %v68 = vld [vmem:[%s2 + $0x38] sm:$0xff]
    %v69 = vld [vmem:[%s3] sm:$0x1]
    %v71 = vlaneseq
    %v72 = vshrl.u32 %v71, 7
    %v73 = vsub.s32 0, %v72
    %v74 = vrot.slane %v69, %v73
    %vm76 = vcmask 523264
    %v78 = vsel %vm76, %v60, 0
    %80 = vmatprep.subr.mxu0 0.0
    %81 = vmatpush1.msra.mxu0 %v61
    %82 = vmatprep.subr.mxu0 0.0
    %83 = vmatpush1.msra.mxu0 %v62
    %84 = vmatprep.subr.mxu0 0.0
    %85 = vmatpush1.msra.mxu0 %v63
    %86 = vmatprep.subr.mxu0 0.0
    %87 = vmatpush1.msra.mxu0 %v64
    %88 = vmatprep.subr.mxu0 0.0
    %89 = vmatpush1.msra.mxu0 %v65
    %90 = vmatprep.subr.mxu0 0.0
    %91 = vmatpush1.msra.mxu0 %v66
    %92 = vmatprep.subr.mxu0 0.0
    %93 = vmatpush1.msra.mxu0 %v67
    %94 = vmatprep.subr.mxu0 0.0
    %95 = vmatpush1.msra.mxu0 %v68
    %96 = vmatprep.subr.mxu0 0.0
    %97 = vmatpush1.msra.mxu0 0.0
    %98 = vmatprep.subr.mxu0 0.0
    %99 = vmatpush1.msra.mxu0 0.0
    %100 = vmatprep.subr.mxu0 0.0
    %101 = vmatpush1.msra.mxu0 0.0
    %102 = vmatprep.subr.mxu0 0.0
    %103 = vmatpush1.msra.mxu0 0.0
    %104 = vmatprep.subr.mxu0 0.0
    %105 = vmatpush1.msra.mxu0 0.0
    %106 = vmatprep.subr.mxu0 0.0
    %107 = vmatpush1.msra.mxu0 0.0
    %108 = vmatprep.subr.mxu0 0.0
    %109 = vmatpush1.msra.mxu0 0.0
    %110 = vmatprep.subr.mxu0 0.0
    %111 = vmatpush1.msra.mxu0 0.0
    %112 = vmatprep.subr.mxu0 0.0
    %113 = vmatpush1.msra.mxu0 0.0
    %114 = vmatprep.subr.mxu0 0.0
    %115 = vmatpush1.msra.mxu0 0.0
    %116 = vmatprep.subr.mxu0 0.0
    %117 = vmatpush1.msra.mxu0 0.0
    %118 = vmatprep.subr.mxu0 0.0
    %119 = vmatpush1.msra.mxu0 0.0
    %120 = vmatprep.subr.mxu0 0.0
    %121 = vmatpush1.msra.mxu0 0.0
    %122 = vmatprep.subr.mxu0 0.0
    %123 = vmatpush1.msra.mxu0 0.0
    %124 = vmatprep.subr.mxu0 0.0
    %125 = vmatpush1.msra.mxu0 0.0
    %126 = vmatprep.subr.mxu0 0.0
    %127 = vmatpush1.msra.mxu0 0.0
    %128 = vmatprep.subr.mxu0 0.0
    %129 = vmatpush1.msra.mxu0 0.0
    %130 = vmatprep.subr.mxu0 0.0
    %131 = vmatpush1.msra.mxu0 0.0
    %132 = vmatprep.subr.mxu0 0.0
    %133 = vmatpush1.msra.mxu0 0.0
    %134 = vmatprep.subr.mxu0 0.0
    %135 = vmatpush1.msra.mxu0 0.0
    %136 = vmatprep.subr.mxu0 0.0
    %137 = vmatpush1.msra.mxu0 0.0
    %138 = vmatprep.subr.mxu0 0.0
    %139 = vmatpush1.msra.mxu0 0.0
    %140 = vmatprep.subr.mxu0 0.0
    %141 = vmatpush1.msra.mxu0 0.0
    %142 = vmatprep.subr.mxu0 0.0
    %143 = vmatpush1.msra.mxu0 0.0
    %144 = vmatprep.mubr.f32.mxu0 0.0
    %145 = vmatmul.mubr.f32.gmra.mrb[0].mxu0 %v78
    %v146 = vpop.f32.mrb[0].mxu0
    %v147 = vadd.f32 %v74, %v146
    %v148 = vpop.f32.mrb[0].mxu0
    %149 = vdwg.mxu0
    %v150 = vmax.f32 %v147, 0.0
    %v151 = vld [vmem:[%s4] sm:$0xff]
    %v152 = vld [vmem:[%s4 + $0x8] sm:$0xff]
    %v153 = vld [vmem:[%s4 + $0x10] sm:$0xff]
    %v154 = vld [vmem:[%s4 + $0x18] sm:$0xff]
    %v155 = vld [vmem:[%s5] sm:$0x1]
    %v157 = vlaneseq
    %v158 = vshrl.u32 %v157, 7
    %v159 = vsub.s32 0, %v158
    %v160 = vrot.slane %v155, %v159
    %vm162 = vcmask 261120
    %v164 = vsel %vm162, %v150, 0
    %166 = vmatprep.subr.mxu0 0.0
    %167 = vmatpush1.msra.mxu0 %v151
    %168 = vmatprep.subr.mxu0 0.0
    %169 = vmatpush1.msra.mxu0 %v152
    %170 = vmatprep.subr.mxu0 0.0
    %171 = vmatpush1.msra.mxu0 %v153
    %172 = vmatprep.subr.mxu0 0.0
    %173 = vmatpush1.msra.mxu0 %v154
    %174 = vmatprep.subr.mxu0 0.0
    %175 = vmatpush1.msra.mxu0 0.0
    %176 = vmatprep.subr.mxu0 0.0
    %177 = vmatpush1.msra.mxu0 0.0
    %178 = vmatprep.subr.mxu0 0.0
    %179 = vmatpush1.msra.mxu0 0.0
    %180 = vmatprep.subr.mxu0 0.0
    %181 = vmatpush1.msra.mxu0 0.0
    %182 = vmatprep.subr.mxu0 0.0
    %183 = vmatpush1.msra.mxu0 0.0
    %184 = vmatprep.subr.mxu0 0.0
    %185 = vmatpush1.msra.mxu0 0.0
    %186 = vmatprep.subr.mxu0 0.0
    %187 = vmatpush1.msra.mxu0 0.0
    %188 = vmatprep.subr.mxu0 0.0
    %189 = vmatpush1.msra.mxu0 0.0
    %190 = vmatprep.subr.mxu0 0.0
    %191 = vmatpush1.msra.mxu0 0.0
    %192 = vmatprep.subr.mxu0 0.0
    %193 = vmatpush1.msra.mxu0 0.0
    %194 = vmatprep.subr.mxu0 0.0
    %195 = vmatpush1.msra.mxu0 0.0
    %196 = vmatprep.subr.mxu0 0.0
    %197 = vmatpush1.msra.mxu0 0.0
    %198 = vmatprep.subr.mxu0 0.0
    %199 = vmatpush1.msra.mxu0 0.0
    %200 = vmatprep.subr.mxu0 0.0
    %201 = vmatpush1.msra.mxu0 0.0
    %202 = vmatprep.subr.mxu0 0.0
    %203 = vmatpush1.msra.mxu0 0.0
    %204 = vmatprep.subr.mxu0 0.0
    %205 = vmatpush1.msra.mxu0 0.0
    %206 = vmatprep.subr.mxu0 0.0
    %207 = vmatpush1.msra.mxu0 0.0
    %208 = vmatprep.subr.mxu0 0.0
    %209 = vmatpush1.msra.mxu0 0.0
    %210 = vmatprep.subr.mxu0 0.0
    %211 = vmatpush1.msra.mxu0 0.0
    %212 = vmatprep.subr.mxu0 0.0
    %213 = vmatpush1.msra.mxu0 0.0
    %214 = vmatprep.subr.mxu0 0.0
    %215 = vmatpush1.msra.mxu0 0.0
    %216 = vmatprep.subr.mxu0 0.0
    %217 = vmatpush1.msra.mxu0 0.0
    %218 = vmatprep.subr.mxu0 0.0
    %219 = vmatpush1.msra.mxu0 0.0
    %220 = vmatprep.subr.mxu0 0.0
    %221 = vmatpush1.msra.mxu0 0.0
    %222 = vmatprep.subr.mxu0 0.0
    %223 = vmatpush1.msra.mxu0 0.0
    %224 = vmatprep.subr.mxu0 0.0
    %225 = vmatpush1.msra.mxu0 0.0
    %226 = vmatprep.subr.mxu0 0.0
    %227 = vmatpush1.msra.mxu0 0.0
    %228 = vmatprep.subr.mxu0 0.0
    %229 = vmatpush1.msra.mxu0 0.0
    %230 = vmatprep.mubr.f32.mxu0 0.0
    %231 = vmatmul.mubr.f32.gmra.mrb[0].mxu0 %v164
    %v232 = vpop.f32.mrb[0].mxu0
    %v233 = vadd.f32 %v160, %v232
    %v234 = vpop.f32.mrb[0].mxu0
    %235 = vdwg.mxu0
    %v236 = vmax.f32 %v233, 0.0
    %v237 = vld [vmem:[%s6] sm:$0xff]
    %v238 = vld [vmem:[%s6 + $0x8] sm:$0xff]
    %v239 = vld [vmem:[%s6 + $0x10] sm:$0xff]
    %v240 = vld [vmem:[%s6 + $0x18] sm:$0xff]
    %v241 = vld [vmem:[%s7] sm:$0x1]
    %v243 = vlaneseq
    %v244 = vshrl.u32 %v243, 7
    %v245 = vsub.s32 0, %v244
    %v246 = vrot.slane %v241, %v245
    %v249 = vsel %vm162, %v236, 0
    %251 = vmatprep.subr.mxu0 0.0
    %252 = vmatpush1.msra.mxu0 %v237
    %253 = vmatprep.subr.mxu0 0.0
    %254 = vmatpush1.msra.mxu0 %v238
    %255 = vmatprep.subr.mxu0 0.0
    %256 = vmatpush1.msra.mxu0 %v239
    %257 = vmatprep.subr.mxu0 0.0
    %258 = vmatpush1.msra.mxu0 %v240
    %259 = vmatprep.subr.mxu0 0.0
    %260 = vmatpush1.msra.mxu0 0.0
    %261 = vmatprep.subr.mxu0 0.0
    %262 = vmatpush1.msra.mxu0 0.0
    %263 = vmatprep.subr.mxu0 0.0
    %264 = vmatpush1.msra.mxu0 0.0
    %265 = vmatprep.subr.mxu0 0.0
    %266 = vmatpush1.msra.mxu0 0.0
    %267 = vmatprep.subr.mxu0 0.0
    %268 = vmatpush1.msra.mxu0 0.0
    %269 = vmatprep.subr.mxu0 0.0
    %270 = vmatpush1.msra.mxu0 0.0
    %271 = vmatprep.subr.mxu0 0.0
    %272 = vmatpush1.msra.mxu0 0.0
    %273 = vmatprep.subr.mxu0 0.0
    %274 = vmatpush1.msra.mxu0 0.0
    %275 = vmatprep.subr.mxu0 0.0
    %276 = vmatpush1.msra.mxu0 0.0
    %277 = vmatprep.subr.mxu0 0.0
    %278 = vmatpush1.msra.mxu0 0.0
    %279 = vmatprep.subr.mxu0 0.0
    %280 = vmatpush1.msra.mxu0 0.0
    %281 = vmatprep.subr.mxu0 0.0
    %282 = vmatpush1.msra.mxu0 0.0
    %283 = vmatprep.subr.mxu0 0.0
    %284 = vmatpush1.msra.mxu0 0.0
    %285 = vmatprep.subr.mxu0 0.0
    %286 = vmatpush1.msra.mxu0 0.0
    %287 = vmatprep.subr.mxu0 0.0
    %288 = vmatpush1.msra.mxu0 0.0
    %289 = vmatprep.subr.mxu0 0.0
    %290 = vmatpush1.msra.mxu0 0.0
    %291 = vmatprep.subr.mxu0 0.0
    %292 = vmatpush1.msra.mxu0 0.0
    %293 = vmatprep.subr.mxu0 0.0
    %294 = vmatpush1.msra.mxu0 0.0
    %295 = vmatprep.subr.mxu0 0.0
    %296 = vmatpush1.msra.mxu0 0.0
    %297 = vmatprep.subr.mxu0 0.0
    %298 = vmatpush1.msra.mxu0 0.0
    %299 = vmatprep.subr.mxu0 0.0
    %300 = vmatpush1.msra.mxu0 0.0
    %301 = vmatprep.subr.mxu0 0.0
    %302 = vmatpush1.msra.mxu0 0.0
    %303 = vmatprep.subr.mxu0 0.0
    %304 = vmatpush1.msra.mxu0 0.0
    %305 = vmatprep.subr.mxu0 0.0
    %306 = vmatpush1.msra.mxu0 0.0
    %307 = vmatprep.subr.mxu0 0.0
    %308 = vmatpush1.msra.mxu0 0.0
    %309 = vmatprep.subr.mxu0 0.0
    %310 = vmatpush1.msra.mxu0 0.0
    %311 = vmatprep.subr.mxu0 0.0
    %312 = vmatpush1.msra.mxu0 0.0
    %313 = vmatprep.subr.mxu0 0.0
    %314 = vmatpush1.msra.mxu0 0.0
    %315 = vmatprep.mubr.f32.mxu0 0.0
    %316 = vmatmul.mubr.f32.gmra.mrb[0].mxu0 %v249
    %v317 = vpop.f32.mrb[0].mxu0
    %v318 = vadd.f32 %v246, %v317
    %v319 = vpop.f32.mrb[0].mxu0
    %320 = vdwg.mxu0
    %v321 = vmul.f32 %v318, 0.5
    %v322 = vmul.f32 %v321, 1.442695
    %v323 = vpow.pop %v322
    %v324 = vld [vmem:[#allocation2] sm:$0xff]
    %v325 = vmul.f32 %v324, %v323
    %v326 = vadd.f32 %v318, %v325
    %v327 = vld [vmem:[%s8] sm:$0xff]
    %v328 = vld [vmem:[%s9] sm:$0x1]
    %v330 = vlaneseq
    %v331 = vshrl.u32 %v330, 7
    %v332 = vsub.s32 0, %v331
    %v333 = vrot.slane %v328, %v332
    %vm335 = vcmask 64512
    %v337 = vsel %vm335, %v326, 0
    %339 = vmatprep.subr.mxu0 0.0
    %340 = vmatpush1.msra.mxu0 %v327
    %341 = vmatprep.subr.mxu0 0.0
    %342 = vmatpush1.msra.mxu0 0.0
    %343 = vmatprep.subr.mxu0 0.0
    %344 = vmatpush1.msra.mxu0 0.0
    %345 = vmatprep.subr.mxu0 0.0
    %346 = vmatpush1.msra.mxu0 0.0
    %347 = vmatprep.subr.mxu0 0.0
    %348 = vmatpush1.msra.mxu0 0.0
    %349 = vmatprep.subr.mxu0 0.0
    %350 = vmatpush1.msra.mxu0 0.0
    %351 = vmatprep.subr.mxu0 0.0
    %352 = vmatpush1.msra.mxu0 0.0
    %353 = vmatprep.subr.mxu0 0.0
    %354 = vmatpush1.msra.mxu0 0.0
    %355 = vmatprep.subr.mxu0 0.0
    %356 = vmatpush1.msra.mxu0 0.0
    %357 = vmatprep.subr.mxu0 0.0
    %358 = vmatpush1.msra.mxu0 0.0
    %359 = vmatprep.subr.mxu0 0.0
    %360 = vmatpush1.msra.mxu0 0.0
    %361 = vmatprep.subr.mxu0 0.0
    %362 = vmatpush1.msra.mxu0 0.0
    %363 = vmatprep.subr.mxu0 0.0
    %364 = vmatpush1.msra.mxu0 0.0
    %365 = vmatprep.subr.mxu0 0.0
    %366 = vmatpush1.msra.mxu0 0.0
    %367 = vmatprep.subr.mxu0 0.0
    %368 = vmatpush1.msra.mxu0 0.0
    %369 = vmatprep.subr.mxu0 0.0
    %370 = vmatpush1.msra.mxu0 0.0
    %371 = vmatprep.subr.mxu0 0.0
    %372 = vmatpush1.msra.mxu0 0.0
    %373 = vmatprep.subr.mxu0 0.0
    %374 = vmatpush1.msra.mxu0 0.0
    %375 = vmatprep.subr.mxu0 0.0
    %376 = vmatpush1.msra.mxu0 0.0
    %377 = vmatprep.subr.mxu0 0.0
    %378 = vmatpush1.msra.mxu0 0.0
    %379 = vmatprep.subr.mxu0 0.0
    %380 = vmatpush1.msra.mxu0 0.0
    %381 = vmatprep.subr.mxu0 0.0
    %382 = vmatpush1.msra.mxu0 0.0
    %383 = vmatprep.subr.mxu0 0.0
    %384 = vmatpush1.msra.mxu0 0.0
    %385 = vmatprep.subr.mxu0 0.0
    %386 = vmatpush1.msra.mxu0 0.0
    %387 = vmatprep.subr.mxu0 0.0
    %388 = vmatpush1.msra.mxu0 0.0
    %389 = vmatprep.subr.mxu0 0.0
    %390 = vmatpush1.msra.mxu0 0.0
    %391 = vmatprep.subr.mxu0 0.0
    %392 = vmatpush1.msra.mxu0 0.0
    %393 = vmatprep.subr.mxu0 0.0
    %394 = vmatpush1.msra.mxu0 0.0
    %395 = vmatprep.subr.mxu0 0.0
    %396 = vmatpush1.msra.mxu0 0.0
    %397 = vmatprep.subr.mxu0 0.0
    %398 = vmatpush1.msra.mxu0 0.0
    %399 = vmatprep.subr.mxu0 0.0
    %400 = vmatpush1.msra.mxu0 0.0
    %401 = vmatprep.subr.mxu0 0.0
    %402 = vmatpush1.msra.mxu0 0.0
    %403 = vmatprep.mubr.f32.mxu0 0.0
    %404 = vmatmul.mubr.f32.gmra.mrb[0].mxu0 %v337
    %v405 = vpop.f32.mrb[0].mxu0
    %v406 = vadd.f32 %v333, %v405
    %v407 = vpop.f32.mrb[0].mxu0
    %408 = vdwg.mxu0
    %v409 = vmax.f32 %v406, 0.0
    %v410 = vld [vmem:[%s10] sm:$0xff]
    %v411 = vld [vmem:[%s10 + $0x8] sm:$0xff]
    %v412 = vld [vmem:[%s10 + $0x10] sm:$0xff]
    %v413 = vld [vmem:[%s10 + $0x18] sm:$0xff]
    %v414 = vld [vmem:[%s11] sm:$0x1]
    %v416 = vlaneseq
    %v417 = vshrl.u32 %v416, 7
    %v418 = vsub.s32 0, %v417
    %v419 = vrot.slane %v414, %v418
    %v422 = vsel %vm162, %v409, 0
    %424 = vmatprep.subr.mxu0 0.0
    %425 = vmatpush1.msra.mxu0 %v410
    %426 = vmatprep.subr.mxu0 0.0
    %427 = vmatpush1.msra.mxu0 %v411
    %428 = vmatprep.subr.mxu0 0.0
    %429 = vmatpush1.msra.mxu0 %v412
    %430 = vmatprep.subr.mxu0 0.0
    %431 = vmatpush1.msra.mxu0 %v413
    %432 = vmatprep.subr.mxu0 0.0
    %433 = vmatpush1.msra.mxu0 0.0
    %434 = vmatprep.subr.mxu0 0.0
    %435 = vmatpush1.msra.mxu0 0.0
    %436 = vmatprep.subr.mxu0 0.0
    %437 = vmatpush1.msra.mxu0 0.0
    %438 = vmatprep.subr.mxu0 0.0
    %439 = vmatpush1.msra.mxu0 0.0
    %440 = vmatprep.subr.mxu0 0.0
    %441 = vmatpush1.msra.mxu0 0.0
    %442 = vmatprep.subr.mxu0 0.0
    %443 = vmatpush1.msra.mxu0 0.0
    %444 = vmatprep.subr.mxu0 0.0
    %445 = vmatpush1.msra.mxu0 0.0
    %446 = vmatprep.subr.mxu0 0.0
    %447 = vmatpush1.msra.mxu0 0.0
    %448 = vmatprep.subr.mxu0 0.0
    %449 = vmatpush1.msra.mxu0 0.0
    %450 = vmatprep.subr.mxu0 0.0
    %451 = vmatpush1.msra.mxu0 0.0
    %452 = vmatprep.subr.mxu0 0.0
    %453 = vmatpush1.msra.mxu0 0.0
    %454 = vmatprep.subr.mxu0 0.0
    %455 = vmatpush1.msra.mxu0 0.0
    %456 = vmatprep.subr.mxu0 0.0
    %457 = vmatpush1.msra.mxu0 0.0
    %458 = vmatprep.subr.mxu0 0.0
    %459 = vmatpush1.msra.mxu0 0.0
    %460 = vmatprep.subr.mxu0 0.0
    %461 = vmatpush1.msra.mxu0 0.0
    %462 = vmatprep.subr.mxu0 0.0
    %463 = vmatpush1.msra.mxu0 0.0
    %464 = vmatprep.subr.mxu0 0.0
    %465 = vmatpush1.msra.mxu0 0.0
    %466 = vmatprep.subr.mxu0 0.0
    %467 = vmatpush1.msra.mxu0 0.0
    %468 = vmatprep.subr.mxu0 0.0
    %469 = vmatpush1.msra.mxu0 0.0
    %470 = vmatprep.subr.mxu0 0.0
    %471 = vmatpush1.msra.mxu0 0.0
    %472 = vmatprep.subr.mxu0 0.0
    %473 = vmatpush1.msra.mxu0 0.0
    %474 = vmatprep.subr.mxu0 0.0
    %475 = vmatpush1.msra.mxu0 0.0
    %476 = vmatprep.subr.mxu0 0.0
    %477 = vmatpush1.msra.mxu0 0.0
    %478 = vmatprep.subr.mxu0 0.0
    %479 = vmatpush1.msra.mxu0 0.0
    %480 = vmatprep.subr.mxu0 0.0
    %481 = vmatpush1.msra.mxu0 0.0
    %482 = vmatprep.subr.mxu0 0.0
    %483 = vmatpush1.msra.mxu0 0.0
    %484 = vmatprep.subr.mxu0 0.0
    %485 = vmatpush1.msra.mxu0 0.0
    %486 = vmatprep.subr.mxu0 0.0
    %487 = vmatpush1.msra.mxu0 0.0
    %488 = vmatprep.mubr.f32.mxu0 0.0
    %489 = vmatmul.mubr.f32.gmra.mrb[0].mxu0 %v422
    %v490 = vpop.f32.mrb[0].mxu0
    %v491 = vadd.f32 %v419, %v490
    %v492 = vpop.f32.mrb[0].mxu0
    %493 = vdwg.mxu0
    %v494 = vmax.f32 %v491, 0.0
    %v495 = vld [vmem:[%s12] sm:$0xff]
    %v496 = vld [vmem:[%s12 + $0x8] sm:$0xff]
    %v497 = vld [vmem:[%s12 + $0x10] sm:$0xff]
    %v498 = vld [vmem:[%s12 + $0x18] sm:$0xff]
    %v499 = vld [vmem:[%s13] sm:$0x1]
    %v501 = vlaneseq
    %v502 = vshrl.u32 %v501, 7
    %v503 = vsub.s32 0, %v502
    %v504 = vrot.slane %v499, %v503
    %v507 = vsel %vm162, %v494, 0
    %509 = vmatprep.subr.mxu0 0.0
    %510 = vmatpush1.msra.mxu0 %v495
    %511 = vmatprep.subr.mxu0 0.0
    %512 = vmatpush1.msra.mxu0 %v496
    %513 = vmatprep.subr.mxu0 0.0
    %514 = vmatpush1.msra.mxu0 %v497
    %515 = vmatprep.subr.mxu0 0.0
    %516 = vmatpush1.msra.mxu0 %v498
    %517 = vmatprep.subr.mxu0 0.0
    %518 = vmatpush1.msra.mxu0 0.0
    %519 = vmatprep.subr.mxu0 0.0
    %520 = vmatpush1.msra.mxu0 0.0
    %521 = vmatprep.subr.mxu0 0.0
    %522 = vmatpush1.msra.mxu0 0.0
    %523 = vmatprep.subr.mxu0 0.0
    %524 = vmatpush1.msra.mxu0 0.0
    %525 = vmatprep.subr.mxu0 0.0
    %526 = vmatpush1.msra.mxu0 0.0
    %527 = vmatprep.subr.mxu0 0.0
    %528 = vmatpush1.msra.mxu0 0.0
    %529 = vmatprep.subr.mxu0 0.0
    %530 = vmatpush1.msra.mxu0 0.0
    %531 = vmatprep.subr.mxu0 0.0
    %532 = vmatpush1.msra.mxu0 0.0
    %533 = vmatprep.subr.mxu0 0.0
    %534 = vmatpush1.msra.mxu0 0.0
    %535 = vmatprep.subr.mxu0 0.0
    %536 = vmatpush1.msra.mxu0 0.0
    %537 = vmatprep.subr.mxu0 0.0
    %538 = vmatpush1.msra.mxu0 0.0
    %539 = vmatprep.subr.mxu0 0.0
    %540 = vmatpush1.msra.mxu0 0.0
    %541 = vmatprep.subr.mxu0 0.0
    %542 = vmatpush1.msra.mxu0 0.0
    %543 = vmatprep.subr.mxu0 0.0
    %544 = vmatpush1.msra.mxu0 0.0
    %545 = vmatprep.subr.mxu0 0.0
    %546 = vmatpush1.msra.mxu0 0.0
    %547 = vmatprep.subr.mxu0 0.0
    %548 = vmatpush1.msra.mxu0 0.0
    %549 = vmatprep.subr.mxu0 0.0
    %550 = vmatpush1.msra.mxu0 0.0
    %551 = vmatprep.subr.mxu0 0.0
    %552 = vmatpush1.msra.mxu0 0.0
    %553 = vmatprep.subr.mxu0 0.0
    %554 = vmatpush1.msra.mxu0 0.0
    %555 = vmatprep.subr.mxu0 0.0
    %556 = vmatpush1.msra.mxu0 0.0
    %557 = vmatprep.subr.mxu0 0.0
    %558 = vmatpush1.msra.mxu0 0.0
    %559 = vmatprep.subr.mxu0 0.0
    %560 = vmatpush1.msra.mxu0 0.0
    %561 = vmatprep.subr.mxu0 0.0
    %562 = vmatpush1.msra.mxu0 0.0
    %563 = vmatprep.subr.mxu0 0.0
    %564 = vmatpush1.msra.mxu0 0.0
    %565 = vmatprep.subr.mxu0 0.0
    %566 = vmatpush1.msra.mxu0 0.0
    %567 = vmatprep.subr.mxu0 0.0
    %568 = vmatpush1.msra.mxu0 0.0
    %569 = vmatprep.subr.mxu0 0.0
    %570 = vmatpush1.msra.mxu0 0.0
    %571 = vmatprep.subr.mxu0 0.0
    %572 = vmatpush1.msra.mxu0 0.0
    %573 = vmatprep.mubr.f32.mxu0 0.0
    %574 = vmatmul.mubr.f32.gmra.mrb[0].mxu0 %v507
    %v575 = vpop.f32.mrb[0].mxu0
    %v576 = vadd.f32 %v504, %v575
    %v577 = vpop.f32.mrb[0].mxu0
    %578 = vdwg.mxu0
    %v579 = vxor.u32 %v576, 2147483648
    %v580 = vmul.f32 %v579, 1.442695
    %v581 = vpow.pop %v580
    %v582 = vadd.f32 %v581, 1.0
    %v583 = vrcp.pop %v582
    %v584 = vmul.f32 1.0, %v583
    %586 = vrot.lane.b32.xlu0 %v318, 64
    %v587 = vpop.permute.xlu0 %586
    %589 = vrot.lane.b32.xlu0 %v326, 72
    %v590 = vpop.permute.xlu0 %589
    %v592 = vsel %vm76, %v584, %v587
    %vm593 = vcmask 588800
    %v594 = vsel %vm593, %v592, %v590
    %vm595 = vcmask 654336
    %v596 = vsel %vm595, %v594, 0.0
    %597 = vst [vmem:[#allocation5] sm:$0xff] %v596
    // Predicated region
    $region62: #{tpu_custom_call.1} parent=1 // pred_check
      _
    $region63: #{tpu_custom_call.1} parent=1 // pred_check_branch
      %599 = sbr.rel (0) target = $region65
    $region64: #{tpu_custom_call.1} parent=1 // pred_region
      %s601 = ssub.s32 128, 128
      %602 = vsyncadd [#allocation4], %s601
      %s604 = sshll.u32 [#allocation5], 4
      %s605 = int_to_ptr.vmem [resolvable:$true] %s604
      %607 = dma.vmem_to_hbm [thread:$0]  %s605, 128, %s14, [#allocation4]
    $region65: #{tpu_custom_call.1} parent=1 // pred_fallthru
      _
    // Predicated region
    $region66: #{tpu_custom_call.1} parent=1 // pred_check
      _
    $region67: #{tpu_custom_call.1} parent=1 // pred_check_branch
      %609 = sbr.rel (0) target = $region69
    $region68: #{tpu_custom_call.1} parent=1 // pred_region
      %610 = dma.done [#allocation4], 128
    $region69: #{tpu_custom_call.1} parent=1 // pred_fallthru
      _
    %611 = vsyncpa [#allocation3], 1
    %612 = vsyncpa [#allocation4], 1

</llo_original>
